<compile_context>
chip_gen: v5e
topology: v5e:2x2
jax: 0.10.0
libtpu: 0.0.40
codegen_flags: <defaults>
</compile_context>

<pallas_src>
import functools
import math

import jax
import jax.numpy as jnp
from jax import lax
from jax.experimental import pallas as pl
from jax.experimental.pallas import tpu as pltpu

# Explicit scoped-VMEM limit: equals the v6e/v7x default, raises v5e's 16 MiB
# default, and stays well under v7x's 64 MiB physical VMEM.
_VMEM_LIMIT_BYTES = 32 * 1024 * 1024


def _cdiv(a, b):
    return -(-a // b)


def _round_up(x, m):
    return _cdiv(x, m) * m


def _pick_m_tile(M, target, align=8):
    """Balanced row tile: smallest block count for `target`, then even split."""
    if M <= target:
        return M
    n_blocks = _cdiv(M, target)
    return _round_up(_cdiv(M, n_blocks), align)


def _pick_n_tile(N, target):
    """Largest divisor of N <= target that is a multiple of 256 (full MXU
    width on v6e/v7x), then 128; falls back to a balanced 128-aligned tile."""
    if N <= target:
        return N
    for align in (256, 128):
        t = (target // align) * align
        while t >= align:
            if N % t == 0:
                return t
            t -= align
    n_blocks = _cdiv(N, target)
    return _round_up(_cdiv(N, n_blocks), 128)


# ----------------------------------------------------------------------------
# Kernel 1: tiled fused linear (matmul + bias) — QKV projection.
# ----------------------------------------------------------------------------
def _linear_kernel(x_ref, w_ref, b_ref, o_ref, *, compute_dtype):
    # x: (TM, K) f32, w: (K, TN) f32, b: (1, TN) f32 -> o: (TM, TN).
    # Cast to the MXU compute dtype in-kernel (VPU work hidden under the MXU);
    # accumulate in f32.
    x = x_ref[...].astype(compute_dtype)
    w = w_ref[...].astype(compute_dtype)
    acc = jnp.dot(x, w, preferred_element_type=jnp.float32)
    o_ref[...] = (acc + b_ref[...]).astype(o_ref.dtype)


def pallas_linear(x2d, w, b, *, compute_dtype=jnp.bfloat16, out_dtype=jnp.float32,
                  tm_target=512, tn_target=768):
    """out = x2d @ w + b, tiled over (M, N); MXU operands cast in-kernel."""
    M, K = x2d.shape
    Kw, N = w.shape
    assert K == Kw
    tm = _pick_m_tile(M, tm_target)
    tn = _pick_n_tile(N, tn_target)
    grid = (_cdiv(M, tm), _cdiv(N, tn))
    kernel = functools.partial(_linear_kernel, compute_dtype=compute_dtype)
    return pl.pallas_call(
        kernel,
        out_shape=jax.ShapeDtypeStruct((M, N), out_dtype),
        grid=grid,
        in_specs=[
            pl.BlockSpec((tm, K), lambda i, j: (i, 0)),
            pl.BlockSpec((K, tn), lambda i, j: (0, j)),
            pl.BlockSpec((1, tn), lambda i, j: (0, j)),
        ],
        out_specs=pl.BlockSpec((tm, tn), lambda i, j: (i, j)),
        compiler_params=pltpu.CompilerParams(
            dimension_semantics=("parallel", "parallel"),
            vmem_limit_bytes=_VMEM_LIMIT_BYTES),
    )(x2d, w, b.reshape(1, N).astype(jnp.float32))


# ----------------------------------------------------------------------------
# Kernel 2: fused multi-head attention + output dense projection.
# One batch element per grid step; heads processed in 128-lane-aligned groups.
# ----------------------------------------------------------------------------
def _heads_per_group(num_heads, head_dim):
    """# heads whose q/k/v slabs tile 128 lanes exactly (2 for hd=64)."""
    if head_dim >= 128 or 128 % head_dim != 0:
        return 1
    g = min(128 // head_dim, num_heads)
    while num_heads % g:
        g -= 1
    return max(g, 1)


def _attn_dense_kernel(qkv_ref, wd_ref, bd_ref, o_ref, ctx_ref, *,
                       hidden_size, num_heads, head_dim, heads_per_group,
                       compute_dtype):
    # qkv_ref: (1, S, 3H) with column layout [Q_allheads | K_allheads | V_allheads]
    # wd_ref:  (H, H) f32, bd_ref: (1, H) f32, o_ref: (1, S, H)
    # ctx_ref: (S, H) f32 VMEM scratch (lane-dense context accumulator).
    H = hidden_size
    hpg = heads_per_group
    W = hpg * head_dim                      # group slab width (128 for hd=64 pairs)
    n_groups = num_heads // hpg
    scale = 1.0 / math.sqrt(head_dim)

    def process_group(g):
        if isinstance(g, int):
            off = g * W
        else:
            off = pl.multiple_of(g * W, W)  # 128-aligned dynamic offset
        # 128-lane-aligned slab loads covering `hpg` heads at once.
        q_slab = qkv_ref[0, :, pl.ds(off, W)]
        k_slab = qkv_ref[0, :, pl.ds(H + off, W)]
        v_slab = qkv_ref[0, :, pl.ds(2 * H + off, W)]

        parts = []
        for i in range(hpg):
            lo, hi = i * head_dim, (i + 1) * head_dim
            q = q_slab[:, lo:hi]
            k = k_slab[:, lo:hi]
            v = v_slab[:, lo:hi]
            # q @ k^T without materializing k^T: contract last dim of both.
            s = lax.dot_general(q, k, dimension_numbers=(((1,), (1,)), ((), ())),
                                preferred_element_type=jnp.float32)  # (S, S) f32
            # Apply 1/sqrt(hd) on the f32 scores (exact for any head dim).
            s = s * scale
            # Numerically stable softmax, all elementwise math in f32.
            s = s - jnp.max(s, axis=-1, keepdims=True)
            p = jnp.exp(s)
            denom = jnp.sum(p, axis=-1, keepdims=True)
            r = pl.reciprocal(denom, approx=True)    # EUP vrcp (free VLIW slot)
            r = r * (2.0 - denom * r)                # one Newton step -> ~f32 accuracy
            p = p * r
            # attention_dropout is identity in inference mode.
            parts.append(jnp.dot(p.astype(v.dtype), v,
                                 preferred_element_type=jnp.float32))
        # Lane-dense, 128-aligned writeback of the whole group (no 12-way concat).
        ctx_grp = parts[0] if hpg == 1 else jnp.concatenate(parts, axis=-1)
        ctx_ref[:, pl.ds(off, W)] = ctx_grp

    if n_groups == 1:
        process_group(0)
    else:
        def body(g, carry):
            process_group(g)
            return carry
        # Bound live ranges: iterate head groups instead of a full Python unroll.
        lax.fori_loop(0, n_groups, body, 0, unroll=2)

    # Fused output projection from the lane-dense scratch (dropout = identity).
    ctx = ctx_ref[...]
    out = jnp.dot(ctx.astype(compute_dtype), wd_ref[...].astype(compute_dtype),
                  preferred_element_type=jnp.float32)
    o_ref[0] = (out + bd_ref[...]).astype(o_ref.dtype)


def pallas_attention_dense(qkv, w_dense, b_dense, num_heads, *,
                           compute_dtype=jnp.bfloat16, out_dtype=jnp.float32):
    B, S, H3 = qkv.shape
    H = H3 // 3
    head_dim = H // num_heads
    hpg = _heads_per_group(num_heads, head_dim)
    kernel = functools.partial(
        _attn_dense_kernel, hidden_size=H, num_heads=num_heads,
        head_dim=head_dim, heads_per_group=hpg, compute_dtype=compute_dtype)
    return pl.pallas_call(
        kernel,
        out_shape=jax.ShapeDtypeStruct((B, S, H), out_dtype),
        grid=(B,),
        in_specs=[
            pl.BlockSpec((1, S, H3), lambda b: (b, 0, 0)),   # all heads of one batch elem
            pl.BlockSpec((H, H), lambda b: (0, 0)),          # w_dense resident across grid
            pl.BlockSpec((1, H), lambda b: (0, 0)),          # b_dense resident across grid
        ],
        out_specs=pl.BlockSpec((1, S, H), lambda b: (b, 0, 0)),
        scratch_shapes=[pltpu.VMEM((S, H), jnp.float32)],
        compiler_params=pltpu.CompilerParams(
            dimension_semantics=("parallel",),
            vmem_limit_bytes=_VMEM_LIMIT_BYTES),
    )(qkv, w_dense, b_dense.reshape(1, H).astype(jnp.float32))


# ----------------------------------------------------------------------------
# Full forward
# ----------------------------------------------------------------------------
def vit_self_attention_forward(x, params, num_heads, *,
                               compute_dtype=jnp.bfloat16, out_dtype=jnp.float32,
                               qkv_tm_target=512, qkv_tn_target=768):
    B, S, H = x.shape
    head_dim = H // num_heads
    # Regroup QKV weight/bias columns once: PyTorch interleaves per-head
    # [q|k|v] blocks of width 3*hd; regroup to [Q_allheads | K_allheads | V_allheads]
    # so the attention kernel reads 128-lane-aligned head-pair slabs.
    # (In a real model, pre-permute the parameters once outside the step.)
    w_qkv = params["w_qkv"].reshape(H, num_heads, 3, head_dim)
    w_qkv = w_qkv.transpose(0, 2, 1, 3).reshape(H, 3 * H)
    b_qkv = params["b_qkv"].reshape(num_heads, 3, head_dim)
    b_qkv = b_qkv.transpose(1, 0, 2).reshape(3 * H)

    # QKV projection; intermediate kept in the compute dtype so the attention
    # kernel's HBM reads are halved in bf16 mode (documented deviation from
    # the all-f32 PyTorch module, covered by the bf16 tolerance).
    qkv = pallas_linear(x.reshape(B * S, H), w_qkv, b_qkv,
                        compute_dtype=compute_dtype, out_dtype=compute_dtype,
                        tm_target=qkv_tm_target, tn_target=qkv_tn_target)
    qkv = qkv.reshape(B, S, 3 * H)
    # Fused attention + output dense; head slicing happens in-kernel, so no
    # HBM transpose/split of q/k/v is materialized.
    return pallas_attention_dense(qkv, params["w_dense"], params["b_dense"],
                                  num_heads, compute_dtype=compute_dtype,
                                  out_dtype=out_dtype)


# ----------------------------------------------------------------------------
# Deterministic parameter init (shapes from the module's __init__):
#   query_key_value: Linear(H, 3H) - xavier_uniform weight, normal(std=1e-6) bias
#   dense:           Linear(H, H)  - xavier_uniform weight, normal(std=1e-6) bias
# ----------------------------------------------------------------------------
def init_params(key, hidden_size):
    k1, k2, k3, k4 = jax.random.split(key, 4)

    def xavier_uniform(k, fan_in, fan_out):
        limit = math.sqrt(6.0 / (fan_in + fan_out))
        # stored as (in, out) so forward is x @ W (same math as x @ W_torch.T)
        return jax.random.uniform(
            k, (fan_in, fan_out), jnp.float32, minval=-limit, maxval=limit)

    return {
        "w_qkv": xavier_uniform(k1, hidden_size, 3 * hidden_size),
        "b_qkv": 1e-6 * jax.random.normal(k2, (3 * hidden_size,), jnp.float32),
        "w_dense": xavier_uniform(k3, hidden_size, hidden_size),
        "b_dense": 1e-6 * jax.random.normal(k4, (hidden_size,), jnp.float32),
    }


# ----------------------------------------------------------------------------
# Pure-JAX reference for correctness checks (original parameter layout).
# ----------------------------------------------------------------------------
def reference_forward(x, params, num_heads):
    B, S, H = x.shape
    hd = H // num_heads
    qkv = x @ params["w_qkv"] + params["b_qkv"]
    qkv = qkv.reshape(B, S, num_heads, 3 * hd).transpose(0, 2, 1, 3)
    q, k, v = jnp.split(qkv, 3, axis=-1)
    s = jnp.einsum("bhqd,bhkd->bhqk", q, k) / math.sqrt(hd)
    p = jax.nn.softmax(s, axis=-1)
    ctx = jnp.einsum("bhqk,bhkd->bhqd", p, v)
    ctx = ctx.transpose(0, 2, 1, 3).reshape(B, S, H)
    return ctx @ params["w_dense"] + params["b_dense"]


if __name__ == "__main__":
    def check(B, S, H, NH, *, tm_target=512, tn_target=768, label=""):
        key = jax.random.PRNGKey(0)
        kx, kp = jax.random.split(key)
        x = jax.random.normal(kx, (B, S, H), jnp.float32)
        params = init_params(kp, H)
        ref = reference_forward(x, params, NH)

        # 1) f32 MXU path: tight check of the exact module semantics.
        out_f32 = vit_self_attention_forward(
            x, params, NH, compute_dtype=jnp.float32,
            qkv_tm_target=tm_target, qkv_tn_target=tn_target)
        out_f32 = jax.block_until_ready(out_f32)
        assert out_f32.shape == (B, S, H)
        assert jnp.allclose(out_f32, ref, atol=1e-3, rtol=1e-3), \
            f"f32 mismatch vs reference ({label})"

        # 2) bf16 MXU path (production config): f32 accumulation + f32 softmax,
        #    looser tolerance for bf16 rounding of the qkv intermediate.
        out_bf16 = vit_self_attention_forward(
            x, params, NH, compute_dtype=jnp.bfloat16,
            qkv_tm_target=tm_target, qkv_tn_target=tn_target)
        out_bf16 = jax.block_until_ready(out_bf16)
        assert out_bf16.shape == (B, S, H)
        assert jnp.allclose(out_bf16, ref, atol=7e-2, rtol=7e-2), \
            f"bf16 mismatch vs reference ({label})"

    # Tiny shapes: single tile everywhere, all heads in one group.
    check(2, 8, 32, 4, label="tiny")
    # Medium shapes: forces a multi-block grid with a PARTIAL last M tile in
    # kernel 1 (M=80, tm=32), plus 128-lane head-pair slabs and the fori_loop
    # group path (NH=4, hd=64 -> 2 groups) in kernel 2.
    check(2, 40, 256, 4, tm_target=32, tn_target=256, label="medium")

    print("KERNEL_OK")
</pallas_src>

<mosaic_0001>
module attributes {stable_mosaic.version = 11 : i64} {
  func.func @_linear_kernel(%arg0: i32, %arg1: i32, %arg2: memref<16x32xf32, #tpu.memory_space<vmem>>, %arg3: memref<32x96xf32, #tpu.memory_space<vmem>>, %arg4: memref<1x96xf32, #tpu.memory_space<vmem>>, %arg5: memref<16x96xf32, #tpu.memory_space<vmem>>) attributes {dimension_semantics = [#tpu.dimension_semantics<parallel>, #tpu.dimension_semantics<parallel>], iteration_bounds = array<i64: 1, 1>, scalar_prefetch = 0 : i64, scratch_operands = 0 : i64, tpu.core_type = #tpu.core_type<tc>, window_params = [{transform_indices = @transform_0, window_bounds = array<i64: 16, 32>}, {transform_indices = @transform_1, window_bounds = array<i64: 32, 96>}, {transform_indices = @transform_2, window_bounds = array<i64: 1, 96>}, {transform_indices = @transform_3, window_bounds = array<i64: 16, 96>}]} {
    %c0 = arith.constant 0 : index
    %c0_0 = arith.constant 0 : index
    %0 = vector.load %arg2[%c0, %c0_0] : memref<16x32xf32, #tpu.memory_space<vmem>>, vector<16x32xf32>
    %c0_1 = arith.constant 0 : index
    %c0_2 = arith.constant 0 : index
    %1 = vector.load %arg3[%c0_1, %c0_2] : memref<32x96xf32, #tpu.memory_space<vmem>>, vector<32x96xf32>
    %cst = arith.constant dense<0.000000e+00> : vector<16x96xf32>
    %2 = tpu.matmul %0, %1, %cst {dimension_numbers = #tpu.dot_dimension_numbers<[1], [0], [0], [1], [0, 0, 1, 1], [], []>} : vector<16x32xf32>, vector<32x96xf32>, vector<16x96xf32> -> vector<16x96xf32>
    %c0_3 = arith.constant 0 : index
    %c0_4 = arith.constant 0 : index
    %3 = vector.load %arg4[%c0_3, %c0_4] : memref<1x96xf32, #tpu.memory_space<vmem>>, vector<1x96xf32>
    %4 = vector.broadcast %3 : vector<1x96xf32> to vector<16x96xf32>
    %5 = arith.addf %2, %4 : vector<16x96xf32>
    %c0_5 = arith.constant 0 : index
    %c0_6 = arith.constant 0 : index
    %6 = vector.load %arg5[%c0_5, %c0_6] : memref<16x96xf32, #tpu.memory_space<vmem>>, vector<16x96xf32>
    tpu.vector_store %arg5[%c0_5, %c0_6], %5 {strides = array<i32>} : memref<16x96xf32, #tpu.memory_space<vmem>>, vector<16x96xf32>,
    return
  }
  func.func @transform_0(%arg0: i32, %arg1: i32) -> (i32, i32) {
    %c0_i32 = arith.constant 0 : i32
    %c0_i32_0 = arith.constant 0 : i32
    return %arg0, %c0_i32 : i32, i32
  }
  func.func @transform_1(%arg0: i32, %arg1: i32) -> (i32, i32) {
    %c0_i32 = arith.constant 0 : i32
    %c0_i32_0 = arith.constant 0 : i32
    return %c0_i32, %arg1 : i32, i32
  }
  func.func @transform_2(%arg0: i32, %arg1: i32) -> (i32, i32) {
    %c0_i32 = arith.constant 0 : i32
    %c0_i32_0 = arith.constant 0 : i32
    return %c0_i32, %arg1 : i32, i32
  }
  func.func @transform_3(%arg0: i32, %arg1: i32) -> (i32, i32) {
    %c0_i32 = arith.constant 0 : i32
    return %arg0, %arg1 : i32, i32
  }
}

</mosaic_0001>

<llo_original>
// kernel: tpu_custom_call.1
$region0: #{tpu_custom_call.1}
  #allocation0 [shape = 'u32[]', space=smem, size = 0x4, offset = 0x4, fixed_abs, tag = 'smem constant byte address 0x4 - core index']
  #allocation1 [shape = 'u32[72,128]{1,0:T(1,128)}', space=vmem, size = 0x9000, scoped, tag = 'internal scratch']
  %s0 = inlined_call_operand.hbm [shape: f32[16,32], index: 0, kind: input, shape index: {}]
  %s1 = inlined_call_operand.hbm [shape: f32[32,96], index: 1, kind: input, shape index: {}]
  %s2 = inlined_call_operand.vmem [shape: f32[1,96], index: 2, kind: input, shape index: {}]
  %s3 = inlined_call_operand.hbm [shape: f32[16,96], index: 3, kind: output, shape index: {}]
  %s4 = sld [smem:[#allocation0]]
  $region30: #{tpu_custom_call.1} parent=0
    _
  %s6 = ssub.s32 1, %s4
  %s7 = scalar_select 0, %s6, %s4
  $region1: #{tpu_custom_call.1} parent=0
    #allocation2 [shape = 'u8[8192]{0}', space=vmem, size = 0x2000, scoped, tag = 'input window, operand 0, single buffered']
    #allocation3 [shape = 's32[1]{0}', space=sflag, size = 0x4, scoped, tag = 'scoped memory for tpu_custom_call.1']
    #allocation4 [shape = 's32[1]{0}', space=sflag, size = 0x4, scoped, tag = 'scoped memory for tpu_custom_call.1']
    #allocation5 [shape = 'u8[16384]{0}', space=vmem, size = 0x4000, scoped, tag = 'input window, operand 1, single buffered']
    #allocation6 [shape = 's32[1]{0}', space=sflag, size = 0x4, scoped, tag = 'scoped memory for tpu_custom_call.1']
    #allocation7 [shape = 'u8[8192]{0}', space=vmem, size = 0x2000, scoped, tag = 'output window, operand 0, single buffered']
    %8 = vsyncpa [#allocation3], 0
    %9 = vsyncpa [#allocation6], 0
    %10 = vsyncpa [#allocation4], 0
    // Predicated region
    $region2: #{tpu_custom_call.1} parent=1 // pred_check
      _
    $region3: #{tpu_custom_call.1} parent=1 // pred_check_branch
      %12 = sbr.rel (0) target = $region5
    $region4: #{tpu_custom_call.1} parent=1 // pred_region
      %14 = vsyncadd [#allocation3], 0
      %s15 = sshll.u32 %s0, 4
      %s16 = int_to_ptr.hbm [resolvable:$true] %s15
      %s17 = sshll.u32 [#allocation2], 4
      %s18 = int_to_ptr.vmem [resolvable:$true] %s17
      %23 = dma.hbm_to_vmem [thread:$0]  %s16, 256, %s18, [#allocation3], 128, 128, 8
    $region5: #{tpu_custom_call.1} parent=1 // pred_fallthru
      _
    // Predicated region
    $region6: #{tpu_custom_call.1} parent=1 // pred_check
      _
    $region7: #{tpu_custom_call.1} parent=1 // pred_check_branch
      %25 = sbr.rel (0) target = $region9
    $region8: #{tpu_custom_call.1} parent=1 // pred_region
      %27 = vsyncadd [#allocation6], 0
      %s28 = sshll.u32 %s1, 4
      %s29 = int_to_ptr.hbm [resolvable:$true] %s28
      %s30 = sshll.u32 [#allocation5], 4
      %s31 = int_to_ptr.vmem [resolvable:$true] %s30
      %36 = dma.hbm_to_vmem [thread:$0]  %s29, 512, %s31, [#allocation6], 128, 128, 8
    $region9: #{tpu_custom_call.1} parent=1 // pred_fallthru
      _
    // Predicated region
    $region10: #{tpu_custom_call.1} parent=1 // pred_check
      _
    $region11: #{tpu_custom_call.1} parent=1 // pred_check_branch
      %38 = sbr.rel (0) target = $region13
    $region12: #{tpu_custom_call.1} parent=1 // pred_region
      _
    $region13: #{tpu_custom_call.1} parent=1 // pred_fallthru
      _
    // Predicated region
    $region14: #{tpu_custom_call.1} parent=1 // pred_check
      _
    $region15: #{tpu_custom_call.1} parent=1 // pred_check_branch
      %40 = sbr.rel (0) target = $region17
    $region16: #{tpu_custom_call.1} parent=1 // pred_region
      %42 = dma.done [#allocation3], 256
    $region17: #{tpu_custom_call.1} parent=1 // pred_fallthru
      _
    // Predicated region
    $region18: #{tpu_custom_call.1} parent=1 // pred_check
      _
    $region19: #{tpu_custom_call.1} parent=1 // pred_check_branch
      %44 = sbr.rel (0) target = $region21
    $region20: #{tpu_custom_call.1} parent=1 // pred_region
      %46 = dma.done [#allocation6], 512
    $region21: #{tpu_custom_call.1} parent=1 // pred_fallthru
      _
    %v47 = vld [vmem:[#allocation2] sm:$0xff]
    %v48 = vld [vmem:[#allocation2 + $0x8] sm:$0xff]
    %v49 = vld [vmem:[#allocation5] sm:$0xff]
    %v50 = vld [vmem:[#allocation5 + $0x8] sm:$0xff]
    %v51 = vld [vmem:[#allocation5 + $0x10] sm:$0xff]
    %v52 = vld [vmem:[#allocation5 + $0x18] sm:$0xff]
    %v53 = vld [vmem:[%s2] sm:$0x1]
    %v55 = vperm.slane %v53, 0
    %vm57 = vcmask 261120
    %v59 = vsel %vm57, %v47, 0
    %v62 = vsel %vm57, %v48, 0
    %64 = vmatpush.msra.mxu0 0.0
    %65 = vmatpush.msra.mxu0 0.0
    %66 = vmatpush.msra.mxu0 0.0
    %67 = vmatpush.msra.mxu0 0.0
    %68 = vmatpush.msra.mxu0 0.0
    %69 = vmatpush.msra.mxu0 0.0
    %70 = vmatpush.msra.mxu0 0.0
    %71 = vmatpush.msra.mxu0 0.0
    %72 = vmatpush.msra.mxu0 0.0
    %73 = vmatpush.msra.mxu0 0.0
    %74 = vmatpush.msra.mxu0 0.0
    %75 = vmatpush.msra.mxu0 0.0
    %76 = vmatpush.msra.mxu0 %v52
    %77 = vmatpush.msra.mxu0 %v51
    %78 = vmatpush.msra.mxu0 %v50
    %79 = vmatpush.msra.mxu0 %v49
    %80 = vmatmul.f32.gmra.mxu0 %v59
    %v81 = vpop.f32.mrf.mxu0
    %v82 = vadd.f32 %v55, %v81
    %83 = vmatmul.f32.gmra.mxu0 %v62
    %v84 = vpop.f32.mrf.mxu0
    %v85 = vadd.f32 %v55, %v84
    %86 = vdwg.mxu0
    %vm87 = vcmask 785408
    %88 = vst.msk [vmem:[#allocation7] sm:$0xff] %vm87, %v82
    %89 = vst.msk [vmem:[#allocation7 + $0x8] sm:$0xff] %vm87, %v85
    // Predicated region
    $region22: #{tpu_custom_call.1} parent=1 // pred_check
      _
    $region23: #{tpu_custom_call.1} parent=1 // pred_check_branch
      %91 = sbr.rel (0) target = $region25
    $region24: #{tpu_custom_call.1} parent=1 // pred_region
      %93 = vsyncadd [#allocation4], 0
      %s94 = sshll.u32 [#allocation7], 4
      %s95 = int_to_ptr.vmem [resolvable:$true] %s94
      %s96 = sshll.u32 %s3, 4
      %s97 = int_to_ptr.hbm [resolvable:$true] %s96
      %102 = dma.vmem_to_hbm [thread:$0]  %s95, 256, %s97, [#allocation4], 128, 128, 8
    $region25: #{tpu_custom_call.1} parent=1 // pred_fallthru
      _
    // Predicated region
    $region26: #{tpu_custom_call.1} parent=1 // pred_check
      _
    $region27: #{tpu_custom_call.1} parent=1 // pred_check_branch
      %104 = sbr.rel (0) target = $region29
    $region28: #{tpu_custom_call.1} parent=1 // pred_region
      %106 = dma.done [#allocation4], 256
    $region29: #{tpu_custom_call.1} parent=1 // pred_fallthru
      _
    %107 = vsyncpa [#allocation3], 1
    %108 = vsyncpa [#allocation6], 1
    %109 = vsyncpa [#allocation4], 1

</llo_original>
